<compile_context>
chip_gen: v7x
topology: tpu7x:2x2x1
jax: 0.10.0
libtpu: 0.0.40
codegen_flags: <defaults>
</compile_context>

<pallas_src>
import jax
import jax.numpy as jnp
from jax.experimental import pallas as pl
from jax.experimental.pallas import tpu as pltpu


# ---------------------------------------------------------------------------
# Pallas kernel: one-hot pair gather (MXU) -> multiply with X -> feature sum
# ---------------------------------------------------------------------------
def mymlp_kernel(pid_ref, xt_ref, betat_ref, out_ref):
    # pid_ref   : (1, TB)   int32   packed pair index  p = Idc*12 + Idm
    # xt_ref    : (F, TB)   f32/bf16  transposed feature block of X
    # betat_ref : (F, NP)   f32     Beta table, transposed, NP padded
    # out_ref   : (1, TB)   f32     per-row weighted feature sums
    np_pad = betat_ref.shape[1]
    tb = pid_ref.shape[1]

    pid = pid_ref[...]                                              # (1, TB)
    # One-hot over the pair axis, batch on lanes: onehot[k, j] = (p[j] == k).
    onehot = (jax.lax.broadcasted_iota(jnp.int32, (np_pad, tb), 0) == pid
              ).astype(jnp.float32)                                 # (NP, TB)

    # Gather Beta rows on the MXU: (F, NP) @ (NP, TB) -> (F, TB).
    beta = jnp.dot(betat_ref[...], onehot,
                   preferred_element_type=jnp.float32)              # (F, TB)

    # output[j] = sum_f X[j, f] * beta_j[f]  -- lane-dense, sublane reduction.
    prod = xt_ref[...].astype(jnp.float32) * beta                   # (F, TB)
    out_ref[...] = jnp.sum(prod, axis=0, keepdims=True)             # (1, TB)


# ---------------------------------------------------------------------------
# Tile-size heuristic: big tiles amortize ~0.35us/step grid overhead, but keep
# >= 2 blocks when possible so v7x's two TensorCores can split the batch.
# ---------------------------------------------------------------------------
def _pick_tb(B, max_tb=2048):
    half = pl.cdiv(B, 2)
    tb = 128 * pl.cdiv(half, 128)
    return int(max(128, min(max_tb, tb)))


# ---------------------------------------------------------------------------
# Wrapper: precompute the (n_catchments*12, F) Beta table, pack ids, tile batch
# ---------------------------------------------------------------------------
def mymlp_forward(Idc, Idm, X, params, *, tb=None, x_dtype=jnp.float32):
    """Pallas implementation of MyMLP.forward (inference; dropout = identity).

    `x_dtype=jnp.bfloat16` halves the dominant HBM stream on v6e/v7x; keep the
    default f32 on v5e.
    """
    def elu(v):
        # F.elu, alpha=1.0 (expm1 for precision at small |v|)
        return jnp.where(v > 0, v, jnp.expm1(v))

    # --- One-time fold (wrapper side, runs once per parameter set) ----------
    Tc = elu(params["embc"] @ params["w1c"] + params["b1c"])     # (NC, H1)
    Tm = elu(params["embm"] @ params["w1m"] + params["b1m"])     # (12, H1)
    n_c = Tc.shape[0]
    n_m = Tm.shape[0]                                            # 12

    # All (catchment, month) pairs -> full Beta lookup table.
    pair = (Tc[:, None, :] * Tm[None, :, :]).reshape(n_c * n_m, -1)   # (NP,H1)
    Beta = elu(elu(pair @ params["w2"] + params["b2"])
               @ params["w3"] + params["b3"])                    # (NP, F)
    # TODO(synk): dropout between fc2 and fc3 is identity (inference); training
    # mode would need per-row masks via pltpu.prng_seed / prng_random_bits.

    n_pairs = Beta.shape[0]
    n_features = Beta.shape[1]
    np_pad = 8 * pl.cdiv(n_pairs, 8)                             # sublane-tidy
    BetaT = jnp.pad(Beta.astype(jnp.float32).T,
                    ((0, 0), (0, np_pad - n_pairs)))             # (F, NP_pad)

    # --- Batch tiling / packing --------------------------------------------
    B = X.shape[0]
    if tb is None:
        tb = _pick_tb(B)
    n_blocks = pl.cdiv(B, tb)
    b_pad = n_blocks * tb
    pad = b_pad - B

    # Single packed pair-index stream, lane-dense (1, B_pad).
    pid = (Idc.astype(jnp.int32) * n_m + Idm.astype(jnp.int32))
    pid = jnp.pad(pid, (0, pad)).reshape(1, b_pad)               # pad -> idx 0
    # X transposed to batch-on-lanes (F, B_pad).
    xt = jnp.pad(X.astype(x_dtype).T, ((0, 0), (0, pad)))        # (F, B_pad)

    out = pl.pallas_call(
        mymlp_kernel,
        out_shape=jax.ShapeDtypeStruct((1, b_pad), jnp.float32),
        grid=(n_blocks,),
        in_specs=[
            pl.BlockSpec((1, tb), lambda i: (0, i)),             # packed ids
            pl.BlockSpec((n_features, tb), lambda i: (0, i)),    # X^T stream
            pl.BlockSpec((n_features, np_pad), lambda i: (0, 0)),  # Beta^T (resident)
        ],
        out_specs=pl.BlockSpec((1, tb), lambda i: (0, i)),       # lane-dense
        compiler_params=pltpu.CompilerParams(
            dimension_semantics=("parallel",)),
    )(pid, xt, BetaT)

    return out[0, :B]                                            # (B,)


# ---------------------------------------------------------------------------
# Deterministic parameter initialization (synthetic, matching module shapes)
# ---------------------------------------------------------------------------
def init_params(key, n_catchments, emb_c, emb_m, hidden_1, hidden_2, n_features):
    ks = jax.random.split(key, 10)
    s = 0.1
    return {
        "embc": s * jax.random.normal(ks[0], (n_catchments, emb_c), jnp.float32),
        "embm": s * jax.random.normal(ks[1], (12, emb_m), jnp.float32),
        # Linear weights stored as (in, out) == torch weight.T
        "w1c": s * jax.random.normal(ks[2], (emb_c, hidden_1), jnp.float32),
        "b1c": s * jax.random.normal(ks[3], (1, hidden_1), jnp.float32),
        "w1m": s * jax.random.normal(ks[4], (emb_m, hidden_1), jnp.float32),
        "b1m": s * jax.random.normal(ks[5], (1, hidden_1), jnp.float32),
        "w2": s * jax.random.normal(ks[6], (hidden_1, hidden_2), jnp.float32),
        "b2": s * jax.random.normal(ks[7], (1, hidden_2), jnp.float32),
        "w3": s * jax.random.normal(ks[8], (hidden_2, n_features), jnp.float32),
        "b3": s * jax.random.normal(ks[9], (1, n_features), jnp.float32),
    }


if __name__ == "__main__":
    # Small shapes consistent with the module's args; B chosen to exercise the
    # batch grid, megacore split (2 blocks) and the padding path.
    B = 200
    n_catchments = 10
    emb_c = 8
    emb_m = 6
    hidden_1 = 32
    hidden_2 = 32
    n_features = 16

    key = jax.random.PRNGKey(0)
    kp, ki1, ki2, kx = jax.random.split(key, 4)

    params = init_params(kp, n_catchments, emb_c, emb_m,
                         hidden_1, hidden_2, n_features)

    Idc = jax.random.randint(ki1, (B,), 0, n_catchments, dtype=jnp.int32)
    Idm = jax.random.randint(ki2, (B,), 0, 12, dtype=jnp.int32)
    X = jax.random.normal(kx, (B, n_features), jnp.float32)

    out = mymlp_forward(Idc, Idm, X, params)
    jax.block_until_ready(out)

    # Pure-JAX reference of the ORIGINAL (unfolded) formulation.
    def elu(v):
        return jnp.where(v > 0, v, jnp.expm1(v))

    xr = elu(params["embc"][Idc] @ params["w1c"] + params["b1c"])
    yr = elu(params["embm"][Idm] @ params["w1m"] + params["b1m"])
    zr = elu((xr * yr) @ params["w2"] + params["b2"])
    betar = elu(zr @ params["w3"] + params["b3"])
    ref = jnp.sum(X * betar, axis=1)

    assert out.shape == (B,)
    assert jnp.allclose(out, ref, atol=1e-4, rtol=1e-4), \
        float(jnp.max(jnp.abs(out - ref)))
    print("KERNEL_OK")
</pallas_src>

<mosaic_0001>
module attributes {stable_mosaic.version = 11 : i64} {
  func.func @mymlp_kernel(%arg0: i32, %arg1: memref<1x128xi32, #tpu.memory_space<vmem>>, %arg2: memref<16x128xf32, #tpu.memory_space<vmem>>, %arg3: memref<16x120xf32, #tpu.memory_space<vmem>>, %arg4: memref<1x128xf32, #tpu.memory_space<vmem>>) attributes {dimension_semantics = [#tpu.dimension_semantics<parallel>], iteration_bounds = array<i64: 2>, scalar_prefetch = 0 : i64, scratch_operands = 0 : i64, tpu.core_type = #tpu.core_type<tc>, window_params = [{transform_indices = @transform_0, window_bounds = array<i64: 1, 128>}, {transform_indices = @transform_1, window_bounds = array<i64: 16, 128>}, {pipeline_mode = #tpu.pipeline_mode<synchronous>, transform_indices = @transform_2, window_bounds = array<i64: 16, 120>}, {transform_indices = @transform_3, window_bounds = array<i64: 1, 128>}]} {
    %c0 = arith.constant 0 : index
    %c0_0 = arith.constant 0 : index
    %0 = vector.load %arg1[%c0, %c0_0] : memref<1x128xi32, #tpu.memory_space<vmem>>, vector<1x128xi32>
    %1 = tpu.iota {dimensions = array<i32: 0>} : vector<120x128xi32>
    %2 = vector.broadcast %0 : vector<1x128xi32> to vector<120x128xi32>
    %3 = arith.cmpi eq, %1, %2 : vector<120x128xi32>
    %4 = arith.extui %3 : vector<120x128xi1> to vector<120x128xi32>
    %5 = arith.sitofp %4 : vector<120x128xi32> to vector<120x128xf32>
    %c0_1 = arith.constant 0 : index
    %c0_2 = arith.constant 0 : index
    %6 = vector.load %arg3[%c0_1, %c0_2] : memref<16x120xf32, #tpu.memory_space<vmem>>, vector<16x120xf32>
    %cst = arith.constant dense<0.000000e+00> : vector<16x128xf32>
    %7 = tpu.matmul %6, %5, %cst {dimension_numbers = #tpu.dot_dimension_numbers<[1], [0], [0], [1], [0, 0, 1, 1], [], []>} : vector<16x120xf32>, vector<120x128xf32>, vector<16x128xf32> -> vector<16x128xf32>
    %c0_3 = arith.constant 0 : index
    %c0_4 = arith.constant 0 : index
    %8 = vector.load %arg2[%c0_3, %c0_4] : memref<16x128xf32, #tpu.memory_space<vmem>>, vector<16x128xf32>
    %9 = arith.mulf %8, %7 : vector<16x128xf32>
    %cst_5 = arith.constant dense<0.000000e+00> : vector<128xf32>
    %10 = vector.multi_reduction <add>, %9, %cst_5 [0] : vector<16x128xf32> to vector<128xf32>
    %11 = vector.shape_cast %10 : vector<128xf32> to vector<1x128xf32>
    %c0_6 = arith.constant 0 : index
    %c0_7 = arith.constant 0 : index
    %12 = vector.load %arg4[%c0_6, %c0_7] : memref<1x128xf32, #tpu.memory_space<vmem>>, vector<1x128xf32>
    tpu.vector_store %arg4[%c0_6, %c0_7], %11 {strides = array<i32>} : memref<1x128xf32, #tpu.memory_space<vmem>>, vector<1x128xf32>,
    return
  }
  func.func @transform_0(%arg0: i32) -> (i32, i32) {
    %c0_i32 = arith.constant 0 : i32
    %c0_i32_0 = arith.constant 0 : i32
    return %c0_i32, %arg0 : i32, i32
  }
  func.func @transform_1(%arg0: i32) -> (i32, i32) {
    %c0_i32 = arith.constant 0 : i32
    %c0_i32_0 = arith.constant 0 : i32
    return %c0_i32, %arg0 : i32, i32
  }
  func.func @transform_2(%arg0: i32) -> (i32, i32) {
    %c0_i32 = arith.constant 0 : i32
    %c0_i32_0 = arith.constant 0 : i32
    %c0_i32_1 = arith.constant 0 : i32
    return %c0_i32, %c0_i32_0 : i32, i32
  }
  func.func @transform_3(%arg0: i32) -> (i32, i32) {
    %c0_i32 = arith.constant 0 : i32
    %c0_i32_0 = arith.constant 0 : i32
    return %c0_i32, %arg0 : i32, i32
  }
}

</mosaic_0001>

<llo_original>
// kernel: tpu_custom_call.1
$region0: #{tpu_custom_call.1}
  #allocation0 [shape = 'u32[]', space=smem, size = 0x4, offset = 0x4, fixed_abs, tag = 'smem constant byte address 0x4 - core index']
  #allocation1 [shape = 'u32[144,128]{1,0:T(1,128)}', space=vmem, size = 0x12000, scoped, tag = 'internal scratch']
  %s0 = inlined_call_operand.hbm [shape: s32[1,256], index: 0, kind: input, shape index: {}]
  %s1 = inlined_call_operand.hbm [shape: f32[16,256], index: 1, kind: input, shape index: {}]
  %s2 = inlined_call_operand.hbm [shape: f32[16,120], index: 2, kind: input, shape index: {}]
  %s3 = inlined_call_operand.hbm [shape: f32[1,256], index: 3, kind: output, shape index: {}]
  %s4 = sld [smem:[#allocation0]]
  $region57: #{tpu_custom_call.1} parent=0
    _
  %s6 = ssub.s32 1, %s4
  %s7 = scalar_select 0, %s6, %s4
  $region1: #{tpu_custom_call.1} parent=0
    #allocation2 [shape = 'u8[1024]{0}', space=vmem, size = 0x400, scoped, tag = 'input window, operand 0']
    #allocation3 [shape = 's32[2]{0}', space=sflag, size = 0x8, scoped, tag = 'scoped memory for tpu_custom_call.1']
    #allocation4 [shape = 's32[2]{0}', space=sflag, size = 0x8, scoped, tag = 'scoped memory for tpu_custom_call.1']
    #allocation5 [shape = 'u8[16384]{0}', space=vmem, size = 0x4000, scoped, tag = 'input window, operand 1']
    #allocation6 [shape = 's32[2]{0}', space=sflag, size = 0x8, scoped, tag = 'scoped memory for tpu_custom_call.1']
    #allocation7 [shape = 'u8[8192]{0}', space=vmem, size = 0x2000, scoped, tag = 'input window, operand 2, single buffered']
    #allocation8 [shape = 'u8[1024]{0}', space=vmem, size = 0x400, scoped, tag = 'output window, operand 0']
    %8 = vsyncpa [#allocation3], 0
    %s9 = scalar_lea.sflag [#allocation3], 1
    %10 = vsyncpa %s9, 0
    %11 = vsyncpa [#allocation6], 0
    %s12 = scalar_lea.sflag [#allocation6], 1
    %13 = vsyncpa %s12, 0
    %14 = vsyncpa [#allocation4], 0
    %s15 = scalar_lea.sflag [#allocation4], 1
    %16 = vsyncpa %s15, 0
    loop: start=0, step=1, limit=4
    $region2: #{tpu_custom_call.1} parent=1 // loop_pre_header
      _
    $region3: #{tpu_custom_call.1} parent=1 // loop_header
      %s18 = sphi 0, %s22
      %p19 = scmp.ge.s32.totalorder %s18, 4
      %s28 = sphi 0, %s30
      %s31 = sphi 0, %s28
      %s32 = sphi 0, %s31
      %s48 = sphi 0, %s32
      %s54 = sphi 0, %s56
      %s57 = sphi 0, %s54
      %s58 = sphi 0, %s57
      %s74 = sphi 0, %s58
      %s78 = sphi 0, %s78
      %s80 = sphi 0, %s78
      %s81 = sphi 0, %s80
      %s95 = sphi 0, %s81
      %s101 = sphi 0, %s103
      %s104 = sphi 0, %s101
      %s105 = sphi 0, %s104
      %s121 = sphi 0, %s105
    $region4: #{tpu_custom_call.1} parent=1 // loop_header_branch
      %21 = sbr.rel (%p19) target = $region8
    $region5: #{tpu_custom_call.1} parent=1 // loop_body
      %s23 = ssub.s32 %s18, 1
      %s24 = ssub.s32 %s18, 2
      %s25 = sadd.s32 %s18, 1
      %s26 = ssub.s32 %s18, %s25
      %p27 = scmp.eq.s32.totalorder %s26, 0
      %s29 = sadd.s32 %s28, 1
      %s30 = scalar_select %p27, %s28, %s29
      %p33 = pneg %p27
      %p34 = scmp.eq.s32.totalorder %s18, 1
      %p35 = por %p33, %p34
      %p36 = scmp.ne.s32.totalorder %s28, %s31
      %p37 = scmp.eq.s32.totalorder %s18, 0
      %p38 = por %p36, %p37
      %p39 = scmp.ne.s32.totalorder %s28, %s31
      %p40 = scmp.eq.s32.totalorder %s23, 1
      %p41 = por %p39, %p40
      %p42 = scmp.ne.s32.totalorder %s31, %s32
      %p43 = scmp.eq.s32.totalorder %s23, 0
      %p44 = por %p42, %p43
      %p45 = scmp.ne.s32.totalorder %s31, %s32
      %p46 = scmp.eq.s32.totalorder %s24, 1
      %p47 = por %p45, %p46
      %p49 = scmp.ne.s32.totalorder %s32, %s48
      %p50 = scmp.eq.s32.totalorder %s24, 0
      %p51 = por %p49, %p50
      %s52 = ssub.s32 %s18, %s25
      %p53 = scmp.eq.s32.totalorder %s52, 0
      %s55 = sadd.s32 %s54, 1
      %s56 = scalar_select %p53, %s54, %s55
      %p59 = pneg %p53
      %p60 = scmp.eq.s32.totalorder %s18, 1
      %p61 = por %p59, %p60
      %p62 = scmp.ne.s32.totalorder %s54, %s57
      %p63 = scmp.eq.s32.totalorder %s18, 0
      %p64 = por %p62, %p63
      %p65 = scmp.ne.s32.totalorder %s54, %s57
      %p66 = scmp.eq.s32.totalorder %s23, 1
      %p67 = por %p65, %p66
      %p68 = scmp.ne.s32.totalorder %s57, %s58
      %p69 = scmp.eq.s32.totalorder %s23, 0
      %p70 = por %p68, %p69
      %p71 = scmp.ne.s32.totalorder %s57, %s58
      %p72 = scmp.eq.s32.totalorder %s24, 1
      %p73 = por %p71, %p72
      %p75 = scmp.ne.s32.totalorder %s58, %s74
      %p76 = scmp.eq.s32.totalorder %s24, 0
      %p77 = por %p75, %p76
      %s79 = sadd.s32 %s78, 1
      %p82 = scmp.eq.s32.totalorder %s18, 1
      %p83 = scmp.ne.s32.totalorder %s78, %s80
      %p84 = scmp.eq.s32.totalorder %s18, 0
      %p85 = por %p83, %p84
      %p86 = scmp.ne.s32.totalorder %s78, %s80
      %p87 = scmp.eq.s32.totalorder %s23, 1
      %p88 = por %p86, %p87
      %p89 = scmp.ne.s32.totalorder %s80, %s81
      %p90 = scmp.eq.s32.totalorder %s23, 0
      %p91 = por %p89, %p90
      %p92 = scmp.ne.s32.totalorder %s80, %s81
      %p93 = scmp.eq.s32.totalorder %s24, 1
      %p94 = por %p92, %p93
      %p96 = scmp.ne.s32.totalorder %s81, %s95
      %p97 = scmp.eq.s32.totalorder %s24, 0
      %p98 = por %p96, %p97
      %s99 = ssub.s32 %s18, %s25
      %p100 = scmp.eq.s32.totalorder %s99, 0
      %s102 = sadd.s32 %s101, 1
      %s103 = scalar_select %p100, %s101, %s102
      %p106 = pneg %p100
      %p107 = scmp.eq.s32.totalorder %s18, 1
      %p108 = por %p106, %p107
      %p109 = scmp.ne.s32.totalorder %s101, %s104
      %p110 = scmp.eq.s32.totalorder %s18, 0
      %p111 = por %p109, %p110
      %p112 = scmp.ne.s32.totalorder %s101, %s104
      %p113 = scmp.eq.s32.totalorder %s23, 1
      %p114 = por %p112, %p113
      %p115 = scmp.ne.s32.totalorder %s104, %s105
      %p116 = scmp.eq.s32.totalorder %s23, 0
      %p117 = por %p115, %p116
      %p118 = scmp.ne.s32.totalorder %s104, %s105
      %p119 = scmp.eq.s32.totalorder %s24, 1
      %p120 = por %p118, %p119
      %p122 = scmp.ne.s32.totalorder %s105, %s121
      %p123 = scmp.eq.s32.totalorder %s24, 0
      %p124 = por %p122, %p123
      %p125 = scmp.le.s32.totalorder 1, %s18
      %p126 = scmp.lt.s32.totalorder %s18, 3
      %p127 = pnand %p125, %p126
      %p128 = pneg %p127
      // Predicated region
      $region9: #{tpu_custom_call.1} parent=5 // pred_check
        _
      $region10: #{tpu_custom_call.1} parent=5 // pred_check_branch
        %130 = sbr.rel (%p127) target = $region12
      $region11: #{tpu_custom_call.1} parent=5 // pred_region
        %s131 = ssub.s32 %s18, 1
        // Predicated region
        $region13: #{tpu_custom_call.1} parent=11 // pred_check
          %p132 = pneg %p91
        $region14: #{tpu_custom_call.1} parent=11 // pred_check_branch
          %134 = sbr.rel (%p132) target = $region16
        $region15: #{tpu_custom_call.1} parent=11 // pred_region
          %s136 = ssub.s32 256, 256
          %137 = vsyncadd [#allocation6], %s136
          %s138 = sshll.u32 [#allocation7], 4
          %s139 = int_to_ptr.vmem [resolvable:$true] %s138
          %144 = dma.hbm_to_vmem [thread:$0]  %s2, 256, %s139, [#allocation6], 128, 128, 8
        $region16: #{tpu_custom_call.1} parent=11 // pred_fallthru
          _
      $region12: #{tpu_custom_call.1} parent=5 // pred_fallthru
        _
      %p145 = scmp.lt.s32.totalorder %s18, 2
      // Predicated region
      $region17: #{tpu_custom_call.1} parent=5 // pred_check
        %p146 = pneg %p145
      $region18: #{tpu_custom_call.1} parent=5 // pred_check_branch
        %148 = sbr.rel (%p146) target = $region20
      $region19: #{tpu_custom_call.1} parent=5 // pred_region
        // Predicated region
        $region21: #{tpu_custom_call.1} parent=19 // pred_check
          %p149 = pneg %p38
        $region22: #{tpu_custom_call.1} parent=19 // pred_check_branch
          %151 = sbr.rel (%p149) target = $region24
        $region23: #{tpu_custom_call.1} parent=19 // pred_region
          %s152 = sand.u32 %s28, 1
          %s153 = scalar_lea.sflag [#allocation3], %s152
          %s154 = sand.u32 %s28, 1
          %s155 = scalar_lea.vmem [#allocation2], %s154
          %s157 = ssub.s32 16, 16
          %158 = vsyncadd %s153, %s157
          %s159 = smul.addr %s18, 16
          %s160 = scalar_lea.hbm %s0, %s159
          %s162 = sshll.u32 %s155, 4
          %s163 = int_to_ptr.vmem [resolvable:$true] %s162
          %165 = dma.hbm_to_vmem [thread:$0]  %s160, 16, %s163, %s153
        $region24: #{tpu_custom_call.1} parent=19 // pred_fallthru
          _
        // Predicated region
        $region25: #{tpu_custom_call.1} parent=19 // pred_check
          %p166 = pneg %p64
        $region26: #{tpu_custom_call.1} parent=19 // pred_check_branch
          %168 = sbr.rel (%p166) target = $region28
        $region27: #{tpu_custom_call.1} parent=19 // pred_region
          %s169 = sand.u32 %s18, 1
          %s170 = scalar_lea.sflag [#allocation6], %s169
          %s171 = sand.u32 %s54, 1
          %s172 = smul.addr %s171, 16
          %s173 = scalar_lea.vmem [#allocation5], %s172
          %s175 = ssub.s32 256, 256
          %176 = vsyncadd %s170, %s175
          %s177 = smul.addr %s18, 128
          %s178 = scalar_lea.hbm %s1, %s177
          %s179 = sshll.u32 %s173, 4
          %s180 = int_to_ptr.vmem [resolvable:$true] %s179
          %185 = dma.hbm_to_vmem [thread:$0]  %s178, 256, %s180, %s170, 256, 128, 8
        $region28: #{tpu_custom_call.1} parent=19 // pred_fallthru
          _
      $region20: #{tpu_custom_call.1} parent=5 // pred_fallthru
        _
      %p186 = scmp.le.s32.totalorder 1, %s18
      %p187 = scmp.lt.s32.totalorder %s18, 3
      %p188 = pnand %p186, %p187
      %p189 = pneg %p188
      // Predicated region
      $region29: #{tpu_custom_call.1} parent=5 // pred_check
        _
      $region30: #{tpu_custom_call.1} parent=5 // pred_check_branch
        %191 = sbr.rel (%p188) target = $region32
      $region31: #{tpu_custom_call.1} parent=5 // pred_region
        %s192 = ssub.s32 %s18, 1
        %s193 = sand.u32 %s31, 1
        %s194 = scalar_lea.sflag [#allocation3], %s193
        %s195 = sand.u32 %s31, 1
        %s196 = scalar_lea.vmem [#allocation2], %s195
        // Predicated region
        $region33: #{tpu_custom_call.1} parent=31 // pred_check
          %p197 = pneg %p44
        $region34: #{tpu_custom_call.1} parent=31 // pred_check_branch
          %199 = sbr.rel (%p197) target = $region36
        $region35: #{tpu_custom_call.1} parent=31 // pred_region
          %200 = dma.done %s194, 16
        $region36: #{tpu_custom_call.1} parent=31 // pred_fallthru
          _
        %s201 = sand.u32 %s23, 1
        %s202 = scalar_lea.sflag [#allocation6], %s201
        %s203 = sand.u32 %s57, 1
        %s204 = smul.addr %s203, 16
        %s205 = scalar_lea.vmem [#allocation5], %s204
        // Predicated region
        $region37: #{tpu_custom_call.1} parent=31 // pred_check
          %p206 = pneg %p70
        $region38: #{tpu_custom_call.1} parent=31 // pred_check_branch
          %208 = sbr.rel (%p206) target = $region40
        $region39: #{tpu_custom_call.1} parent=31 // pred_region
          %209 = dma.done %s202, 256
        $region40: #{tpu_custom_call.1} parent=31 // pred_fallthru
          _
        // Predicated region
        $region41: #{tpu_custom_call.1} parent=31 // pred_check
          %p210 = pneg %p91
        $region42: #{tpu_custom_call.1} parent=31 // pred_check_branch
          %212 = sbr.rel (%p210) target = $region44
        $region43: #{tpu_custom_call.1} parent=31 // pred_region
          %213 = dma.done [#allocation6], 256
        $region44: #{tpu_custom_call.1} parent=31 // pred_fallthru
          _
        %s214 = sand.u32 %s31, 1
        %s215 = scalar_lea.sflag [#allocation3], %s214
        %s216 = sand.u32 %s31, 1
        %s217 = scalar_lea.vmem [#allocation2], %s216
        %p218 = pneg %p44
        %p219 = pneg %p41
        %s220 = sand.u32 %s23, 1
        %s221 = scalar_lea.sflag [#allocation6], %s220
        %s222 = sand.u32 %s57, 1
        %s223 = smul.addr %s222, 16
        %s224 = scalar_lea.vmem [#allocation5], %s223
        %p225 = pneg %p70
        %p226 = pneg %p67
        %p227 = pneg %p91
        %p228 = pneg %p88
        %p229 = pneg %p117
        %p230 = pneg %p114
        %s231 = sand.u32 %s104, 1
        %s232 = scalar_lea.sflag [#allocation4], %s231
        %s233 = sand.u32 %s104, 1
        %s234 = scalar_lea.vmem [#allocation8], %s233
        %v235 = vld [vmem:[%s196] sm:$0x1]
        %v236 = vlaneseq
        %v237 = vshrl.u32 %v236, 7
        %v238 = vadd.s32 %v237, 8
        %v239 = vadd.s32 %v237, 16
        %v240 = vadd.s32 %v237, 24
        %v241 = vadd.s32 %v237, 32
        %v242 = vadd.s32 %v237, 40
        %v243 = vadd.s32 %v237, 48
        %v244 = vadd.s32 %v237, 56
        %v245 = vadd.s32 %v237, 64
        %v246 = vadd.s32 %v237, 72
        %v247 = vadd.s32 %v237, 80
        %v248 = vadd.s32 %v237, 88
        %v249 = vadd.s32 %v237, 96
        %v250 = vadd.s32 %v237, 104
        %v251 = vadd.s32 %v237, 112
        %v252 = vlaneseq
        %v253 = vshrl.u32 %v252, 7
        %v254 = vsub.s32 0, %v253
        %v255 = vrot.slane %v235, %v254
        %vm256 = vcmp.eq.s32.totalorder %v237, %v255
        %vm257 = vcmp.eq.s32.totalorder %v238, %v255
        %vm258 = vcmp.eq.s32.totalorder %v239, %v255
        %vm259 = vcmp.eq.s32.totalorder %v240, %v255
        %vm260 = vcmp.eq.s32.totalorder %v241, %v255
        %vm261 = vcmp.eq.s32.totalorder %v242, %v255
        %vm262 = vcmp.eq.s32.totalorder %v243, %v255
        %vm263 = vcmp.eq.s32.totalorder %v244, %v255
        %vm264 = vcmp.eq.s32.totalorder %v245, %v255
        %vm265 = vcmp.eq.s32.totalorder %v246, %v255
        %vm266 = vcmp.eq.s32.totalorder %v247, %v255
        %vm267 = vcmp.eq.s32.totalorder %v248, %v255
        %vm268 = vcmp.eq.s32.totalorder %v249, %v255
        %vm269 = vcmp.eq.s32.totalorder %v250, %v255
        %vm270 = vcmp.eq.s32.totalorder %v251, %v255
        %v271 = vsel %vm256, 1, 0
        %v272 = vsel %vm257, 1, 0
        %v273 = vsel %vm258, 1, 0
        %v274 = vsel %vm259, 1, 0
        %v275 = vsel %vm260, 1, 0
        %v276 = vsel %vm261, 1, 0
        %v277 = vsel %vm262, 1, 0
        %v278 = vsel %vm263, 1, 0
        %v279 = vsel %vm264, 1, 0
        %v280 = vsel %vm265, 1, 0
        %v281 = vsel %vm266, 1, 0
        %v282 = vsel %vm267, 1, 0
        %v283 = vsel %vm268, 1, 0
        %v284 = vsel %vm269, 1, 0
        %v285 = vsel %vm270, 1, 0
        %v286 = vcvt.s32.f32 %v271
        %v287 = vcvt.s32.f32 %v272
        %v288 = vcvt.s32.f32 %v273
        %v289 = vcvt.s32.f32 %v274
        %v290 = vcvt.s32.f32 %v275
        %v291 = vcvt.s32.f32 %v276
        %v292 = vcvt.s32.f32 %v277
        %v293 = vcvt.s32.f32 %v278
        %v294 = vcvt.s32.f32 %v279
        %v295 = vcvt.s32.f32 %v280
        %v296 = vcvt.s32.f32 %v281
        %v297 = vcvt.s32.f32 %v282
        %v298 = vcvt.s32.f32 %v283
        %v299 = vcvt.s32.f32 %v284
        %v300 = vcvt.s32.f32 %v285
        %v301 = vld [vmem:[#allocation7] sm:$0xff]
        %v302 = vld [vmem:[#allocation7 + $0x8] sm:$0xff]
        %vm303 = vcmask 982016
        %v305 = vsel %vm303, %v301, 0
        %v308 = vsel %vm303, %v302, 0
        %310 = vmatprep.subr.mxu0 0.0
        %311 = vmatpush1.msra.mxu0 %v286
        %312 = vmatprep.subr.mxu0 0.0
        %313 = vmatpush1.msra.mxu0 %v287
        %314 = vmatprep.subr.mxu0 0.0
        %315 = vmatpush1.msra.mxu0 %v288
        %316 = vmatprep.subr.mxu0 0.0
        %317 = vmatpush1.msra.mxu0 %v289
        %318 = vmatprep.subr.mxu0 0.0
        %319 = vmatpush1.msra.mxu0 %v290
        %320 = vmatprep.subr.mxu0 0.0
        %321 = vmatpush1.msra.mxu0 %v291
        %322 = vmatprep.subr.mxu0 0.0
        %323 = vmatpush1.msra.mxu0 %v292
        %324 = vmatprep.subr.mxu0 0.0
        %325 = vmatpush1.msra.mxu0 %v293
        %326 = vmatprep.subr.mxu0 0.0
        %327 = vmatpush1.msra.mxu0 %v294
        %328 = vmatprep.subr.mxu0 0.0
        %329 = vmatpush1.msra.mxu0 %v295
        %330 = vmatprep.subr.mxu0 0.0
        %331 = vmatpush1.msra.mxu0 %v296
        %332 = vmatprep.subr.mxu0 0.0
        %333 = vmatpush1.msra.mxu0 %v297
        %334 = vmatprep.subr.mxu0 0.0
        %335 = vmatpush1.msra.mxu0 %v298
        %336 = vmatprep.subr.mxu0 0.0
        %337 = vmatpush1.msra.mxu0 %v299
        %338 = vmatprep.subr.mxu0 0.0
        %339 = vmatpush1.msra.mxu0 %v300
        %340 = vmatprep.subr.mxu0 0.0
        %341 = vmatpush1.msra.mxu0 0.0
        %342 = vmatprep.subr.mxu0 0.0
        %343 = vmatpush1.msra.mxu0 0.0
        %344 = vmatprep.subr.mxu0 0.0
        %345 = vmatpush1.msra.mxu0 0.0
        %346 = vmatprep.subr.mxu0 0.0
        %347 = vmatpush1.msra.mxu0 0.0
        %348 = vmatprep.subr.mxu0 0.0
        %349 = vmatpush1.msra.mxu0 0.0
        %350 = vmatprep.subr.mxu0 0.0
        %351 = vmatpush1.msra.mxu0 0.0
        %352 = vmatprep.subr.mxu0 0.0
        %353 = vmatpush1.msra.mxu0 0.0
        %354 = vmatprep.subr.mxu0 0.0
        %355 = vmatpush1.msra.mxu0 0.0
        %356 = vmatprep.subr.mxu0 0.0
        %357 = vmatpush1.msra.mxu0 0.0
        %358 = vmatprep.subr.mxu0 0.0
        %359 = vmatpush1.msra.mxu0 0.0
        %360 = vmatprep.subr.mxu0 0.0
        %361 = vmatpush1.msra.mxu0 0.0
        %362 = vmatprep.subr.mxu0 0.0
        %363 = vmatpush1.msra.mxu0 0.0
        %364 = vmatprep.subr.mxu0 0.0
        %365 = vmatpush1.msra.mxu0 0.0
        %366 = vmatprep.subr.mxu0 0.0
        %367 = vmatpush1.msra.mxu0 0.0
        %368 = vmatprep.subr.mxu0 0.0
        %369 = vmatpush1.msra.mxu0 0.0
        %370 = vmatprep.subr.mxu0 0.0
        %371 = vmatpush1.msra.mxu0 0.0
        %372 = vmatprep.subr.mxu0 0.0
        %373 = vmatpush1.msra.mxu0 0.0
        %374 = vmatprep.mubr.f32.mxu0 0.0
        %375 = vmatmul.mubr.f32.gmra.mrb[0].mxu0 %v305
        %v376 = vpop.f32.mrb[0].mxu0
        %v377 = vadd.f32 0.0, %v376
        %v378 = vpop.f32.mrb[0].mxu0
        %379 = vmatprep.mubr.f32.mxu0 0.0
        %380 = vmatmul.mubr.f32.gmra.mrb[0].mxu0 %v308
        %v381 = vpop.f32.mrb[0].mxu0
        %v382 = vadd.f32 0.0, %v381
        %v383 = vpop.f32.mrb[0].mxu0
        %384 = vdwg.mxu0
        %v385 = vld [vmem:[%s205] sm:$0xff]
        %v386 = vld [vmem:[%s205 + $0x8] sm:$0xff]
        %v387 = vmul.f32 %v385, %v377
        %v388 = vmul.f32 %v386, %v382
        %v389 = vadd.f32 %v387, %v388
        %v390 = vrot.slane %v389, 4
        %v391 = vadd.f32 %v389, %v390
        %v392 = vrot.slane %v391, 2
        %v393 = vadd.f32 %v391, %v392
        %v394 = vrot.slane %v393, 1
        %v395 = vadd.f32 %v393, %v394
        %396 = vst [vmem:[%s234] sm:$0x1] %v395
        %s397 = sand.u32 %s104, 1
        %s398 = scalar_lea.sflag [#allocation4], %s397
        %s399 = sand.u32 %s104, 1
        %s400 = scalar_lea.vmem [#allocation8], %s399
        // Predicated region
        $region45: #{tpu_custom_call.1} parent=31 // pred_check
          %p401 = pneg %p114
        $region46: #{tpu_custom_call.1} parent=31 // pred_check_branch
          %403 = sbr.rel (%p401) target = $region48
        $region47: #{tpu_custom_call.1} parent=31 // pred_region
          %s405 = ssub.s32 16, 16
          %406 = vsyncadd %s398, %s405
          %s407 = smul.addr %s23, 16
          %s408 = scalar_lea.hbm %s3, %s407
          %s410 = sshll.u32 %s400, 4
          %s411 = int_to_ptr.vmem [resolvable:$true] %s410
          %413 = dma.vmem_to_hbm [thread:$0]  %s411, 16, %s408, %s398
        $region48: #{tpu_custom_call.1} parent=31 // pred_fallthru
          _
      $region32: #{tpu_custom_call.1} parent=5 // pred_fallthru
        _
      %p414 = scmp.le.s32.totalorder 2, %s18
      // Predicated region
      $region49: #{tpu_custom_call.1} parent=5 // pred_check
        %p415 = pneg %p414
      $region50: #{tpu_custom_call.1} parent=5 // pred_check_branch
        %417 = sbr.rel (%p415) target = $region52
      $region51: #{tpu_custom_call.1} parent=5 // pred_region
        %s418 = ssub.s32 %s18, 2
        // Predicated region
        $region53: #{tpu_custom_call.1} parent=51 // pred_check
          %p419 = pneg %p120
        $region54: #{tpu_custom_call.1} parent=51 // pred_check_branch
          %421 = sbr.rel (%p419) target = $region56
        $region55: #{tpu_custom_call.1} parent=51 // pred_region
          %s422 = sand.u32 %s105, 1
          %s423 = scalar_lea.sflag [#allocation4], %s422
          %s424 = sand.u32 %s105, 1
          %s425 = scalar_lea.vmem [#allocation8], %s424
          %426 = dma.done %s423, 16
        $region56: #{tpu_custom_call.1} parent=51 // pred_fallthru
          _
      $region52: #{tpu_custom_call.1} parent=5 // pred_fallthru
        _
    $region6: #{tpu_custom_call.1} parent=1 // loop_footer
      %s22 = sadd.s32 1, %s18
    $region7: #{tpu_custom_call.1} parent=1 // loop_footer_branch
      %17 = sbr.rel target = $region3
    $region8: #{tpu_custom_call.1} parent=1 // loop_exit
      _
    %427 = vsyncpa [#allocation3], 1
    %s428 = scalar_lea.sflag [#allocation3], 1
    %429 = vsyncpa %s428, 1
    %430 = vsyncpa [#allocation6], 1
    %s431 = scalar_lea.sflag [#allocation6], 1
    %432 = vsyncpa %s431, 1
    %433 = vsyncpa [#allocation4], 1
    %s434 = scalar_lea.sflag [#allocation4], 1
    %435 = vsyncpa %s434, 1

</llo_original>
